<compile_context>
chip_gen: v6e
topology: v6e:2x2x1
jax: 0.10.0
libtpu: 0.0.40
codegen_flags: <defaults>
</compile_context>

<pallas_src>
import functools

import jax
import jax.numpy as jnp
from jax.experimental import pallas as pl
from jax.experimental.pallas import tpu as pltpu

_LANE = 128
_PER_BUF_BYTES = 6 * 1024 * 1024   # target bytes per pipeline buffer of x


def _round_up(v, m):
    return ((v + m - 1) // m) * m


def _choose_tiles(C, hw, itemsize):
    """Pick (channel_tile, spatial_chunk) under the per-buffer VMEM budget."""
    chunk_full = _round_up(hw, _LANE)
    if C * chunk_full * itemsize <= _PER_BUF_BYTES:
        return C, chunk_full                      # whole (C, hw) slab fits
    if C >= 8:
        tc = (_PER_BUF_BYTES // (chunk_full * itemsize)) // 8 * 8
        tc = min(tc, (C // 8) * 8)
        if tc >= 8:
            return tc, chunk_full                 # keep full hw, tile C
        tc = 8
    else:
        tc = C                                    # TC == C (block dim == full dim)
    ck = (_PER_BUF_BYTES // (tc * itemsize)) // _LANE * _LANE
    ck = max(_LANE, min(ck, chunk_full))
    return tc, ck


def _gem_concat_pool_kernel(p_ref, x_ref, o_ref, max_acc, sum_acc, *,
                            eps, inv_hw, hw, chunk, n_sub, needs_mask,
                            p_static):
    """Grid = (B, C-tiles, spatial-chunks); x_ref is (TC, CHUNK)."""
    s = pl.program_id(2)

    @pl.when(s == 0)
    def _init():
        max_acc[...] = jnp.full(max_acc.shape, -jnp.inf, jnp.float32)
        sum_acc[...] = jnp.zeros(sum_acc.shape, jnp.float32)

    tc = max_acc.shape[0]
    p_val = None
    if p_static is None:
        p_val = p_ref[0]                          # dynamic GeM exponent (SMEM)

    base = s * chunk
    lane = None
    if needs_mask:
        lane = jax.lax.broadcasted_iota(jnp.int32, (tc, _LANE), 1)

    def accumulate(i):
        if isinstance(i, int):
            off = i * _LANE
        else:
            off = pl.multiple_of(i * _LANE, _LANE)
        xs = x_ref[:, pl.ds(off, _LANE)].astype(jnp.float32)     # (TC, 128)
        xc = jnp.maximum(xs, eps)

        # clamp(x, eps) ** p  — specialized on a static p when available.
        if p_static is not None:
            p_round = round(p_static)
            if abs(p_static - p_round) < 1e-9 and 1 <= int(p_round) <= 4:
                xp = xc
                for _ in range(int(p_round) - 1):   # p=1..4: pure VPU multiplies
                    xp = xp * xc
            else:
                xp = jnp.exp(jnp.log(xc) * p_static)
        else:
            xp = jnp.exp(jnp.log(xc) * p_val)

        if needs_mask:
            valid = (base + off + lane) < hw
            xs_for_max = jnp.where(valid, xs, -jnp.inf)
            xp = jnp.where(valid, xp, 0.0)
        else:
            xs_for_max = xs

        # Lane-wide accumulation: elementwise VPU max/add, no per-chunk XLU.
        max_acc[...] = jnp.maximum(max_acc[...], xs_for_max)
        sum_acc[...] = sum_acc[...] + xp

    if n_sub <= 8:
        for i in range(n_sub):                    # short trip-count: full unroll
            accumulate(i)
    else:
        def body(i, carry):
            accumulate(i)
            return carry
        jax.lax.fori_loop(0, n_sub, body, 0, unroll=8)

    @pl.when(s == pl.num_programs(2) - 1)
    def _finalize():
        # Single cross-lane (XLU) reduction per (batch, channel-tile).
        mx = jnp.max(max_acc[...], axis=1, keepdims=True)            # (TC, 1)
        mean = jnp.sum(sum_acc[...], axis=1, keepdims=True) * inv_hw  # (TC, 1)
        if p_static is not None:
            if p_static == 1.0:
                gm = mean
            else:
                gm = jnp.exp(jnp.log(mean) * (1.0 / p_static))
        else:
            gm = jnp.exp(jnp.log(mean) * (1.0 / p_val))
        o_ref[:, 0:1] = mx.astype(o_ref.dtype)    # column 0 = max pool
        o_ref[:, 1:2] = gm.astype(o_ref.dtype)    # column 1 = GeM pool


def adaptive_gem_concat_pool2d(x, p, *, eps=1e-6):
    """torch.cat([AdaptiveMaxPool2d((1,1))(x), GeM(p, eps)(x)], 1) for NCHW x."""
    B, C, H, W = x.shape
    hw = H * W
    itemsize = jnp.dtype(x.dtype).itemsize

    tc, chunk = _choose_tiles(C, hw, itemsize)
    n_ctiles = pl.cdiv(C, tc)
    n_chunks = pl.cdiv(hw, chunk)
    n_sub = chunk // _LANE
    needs_mask = (n_chunks * chunk != hw)

    # Static p (Python number) unlocks the pow-free / multiply-chain paths.
    p_is_static = isinstance(p, (int, float))
    p_static = float(p) if p_is_static else None

    x_flat = x.reshape(B, C, hw)                  # free: NCHW is channel-major
    p_arr = jnp.asarray(p_static if p_is_static else p,
                        jnp.float32).reshape(1)

    kernel = functools.partial(
        _gem_concat_pool_kernel,
        eps=float(eps), inv_hw=1.0 / float(hw), hw=hw, chunk=chunk,
        n_sub=n_sub, needs_mask=needs_mask, p_static=p_static,
    )

    out = pl.pallas_call(
        kernel,
        out_shape=jax.ShapeDtypeStruct((B, C, 2), x.dtype),
        grid=(B, n_ctiles, n_chunks),
        in_specs=[
            pl.BlockSpec(memory_space=pltpu.MemorySpace.SMEM),          # p
            pl.BlockSpec((None, tc, chunk), lambda b, c, s: (b, c, s)),  # x tile
        ],
        out_specs=pl.BlockSpec((None, tc, 2), lambda b, c, s: (b, c, 0)),
        scratch_shapes=[
            pltpu.VMEM((tc, _LANE), jnp.float32),   # lane-wide running max
            pltpu.VMEM((tc, _LANE), jnp.float32),   # lane-wide running sum x^p
        ],
        compiler_params=pltpu.CompilerParams(
            dimension_semantics=("parallel", "parallel", "arbitrary"),
            vmem_limit_bytes=32 * 1024 * 1024,
        ),
    )(p_arr, x_flat)

    # (B, C, 2) -> (B, 2, C) -> (B, 2C, 1, 1): [0:C] = max, [C:2C] = GeM.
    return out.transpose(0, 2, 1).reshape(B, 2 * C, 1, 1)


def _reference(x, p, eps=1e-6):
    p = jnp.float32(p)
    mx = jnp.max(x, axis=(2, 3))
    gm = jnp.mean(jnp.maximum(x, eps) ** p, axis=(2, 3)) ** (1.0 / p)
    return jnp.concatenate([mx, gm], axis=1)[:, :, None, None].astype(x.dtype)


if __name__ == "__main__":
    key = jax.random.PRNGKey(0)
    k1, k2 = jax.random.split(key)

    # Case 1: (2, 4, 16, 16) — lane-aligned spatial extent, static p paths.
    x1 = jax.random.normal(k1, (2, 4, 16, 16), jnp.float32)
    fwd_static = jax.jit(adaptive_gem_concat_pool2d, static_argnums=(1,))

    out_p1 = jax.block_until_ready(fwd_static(x1, 1.0))     # GeM default p=1
    assert out_p1.shape == (2, 8, 1, 1), out_p1.shape
    assert bool(jnp.all(jnp.isfinite(out_p1)))
    ref_p1 = _reference(x1, 1.0)
    assert jnp.allclose(out_p1, ref_p1, rtol=1e-4, atol=1e-5), float(
        jnp.max(jnp.abs(out_p1 - ref_p1)))

    out_p3 = jax.block_until_ready(fwd_static(x1, 3.0))     # integer-p fast path
    ref_p3 = _reference(x1, 3.0)
    assert jnp.allclose(out_p3, ref_p3, rtol=1e-4, atol=1e-5), float(
        jnp.max(jnp.abs(out_p3 - ref_p3)))

    # Case 2: dynamic (traced) p -> exp/log EUP path.
    fwd_dyn = jax.jit(adaptive_gem_concat_pool2d)
    out_pd = jax.block_until_ready(fwd_dyn(x1, jnp.float32(2.5)))
    ref_pd = _reference(x1, 2.5)
    assert jnp.allclose(out_pd, ref_pd, rtol=1e-4, atol=1e-5), float(
        jnp.max(jnp.abs(out_pd - ref_pd)))

    # Case 3: ragged spatial extent (H*W = 100 < 128) and C not a multiple
    # of 8 — exercises cdiv + lane masking and the TC == C block path.
    x2 = jax.random.normal(k2, (2, 3, 10, 10), jnp.float32)
    out_r = jax.block_until_ready(fwd_static(x2, 3.0))
    assert out_r.shape == (2, 6, 1, 1), out_r.shape
    ref_r = _reference(x2, 3.0)
    assert jnp.allclose(out_r, ref_r, rtol=1e-4, atol=1e-5), float(
        jnp.max(jnp.abs(out_r - ref_r)))

    print("KERNEL_OK")
</pallas_src>

<mosaic_0001>
module attributes {stable_mosaic.version = 11 : i64} {
  func.func @_gem_concat_pool_kernel(%arg0: i32, %arg1: i32, %arg2: i32, %arg3: memref<1xf32, #tpu.memory_space<smem>>, %arg4: memref<1x4x256xf32, #tpu.memory_space<vmem>>, %arg5: memref<1x4x2xf32, #tpu.memory_space<vmem>>, %arg6: memref<4x128xf32, #tpu.memory_space<vmem>>, %arg7: memref<4x128xf32, #tpu.memory_space<vmem>>) attributes {dimension_semantics = [#tpu.dimension_semantics<parallel>, #tpu.dimension_semantics<parallel>, #tpu.dimension_semantics<arbitrary>], iteration_bounds = array<i64: 2, 1, 1>, scalar_prefetch = 0 : i64, scratch_operands = 2 : i64, tpu.core_type = #tpu.core_type<tc>, window_params = [{transform_indices = @transform_0, window_bounds = array<i64: 1>}, {transform_indices = @transform_1, window_bounds = array<i64: 1, 4, 256>}, {transform_indices = @transform_2, window_bounds = array<i64: 1, 4, 2>}]} {
    %c0_i32 = arith.constant 0 : i32
    %0 = arith.cmpi eq, %arg2, %c0_i32 : i32
    %1 = arith.extui %0 : i1 to i32
    %c0_i32_0 = arith.constant 0 : i32
    %2 = arith.cmpi ne, %1, %c0_i32_0 : i32
    scf.if %2 {
      %cst_24 = arith.constant 0xFF800000 : f32
      %26 = vector.broadcast %cst_24 : f32 to vector<4x128xf32>
      %c0_25 = arith.constant 0 : index
      %c0_26 = arith.constant 0 : index
      %27 = vector.load %arg6[%c0_25, %c0_26] : memref<4x128xf32, #tpu.memory_space<vmem>>, vector<4x128xf32>
      tpu.vector_store %arg6[%c0_25, %c0_26], %26 {strides = array<i32>} : memref<4x128xf32, #tpu.memory_space<vmem>>, vector<4x128xf32>,
      %cst_27 = arith.constant 0.000000e+00 : f32
      %28 = vector.broadcast %cst_27 : f32 to vector<4x128xf32>
      %c0_28 = arith.constant 0 : index
      %c0_29 = arith.constant 0 : index
      %29 = vector.load %arg7[%c0_28, %c0_29] : memref<4x128xf32, #tpu.memory_space<vmem>>, vector<4x128xf32>
      tpu.vector_store %arg7[%c0_28, %c0_29], %28 {strides = array<i32>} : memref<4x128xf32, #tpu.memory_space<vmem>>, vector<4x128xf32>,
    } else {
    }
    %c0 = arith.constant 0 : index
    %c0_1 = arith.constant 0 : index
    %c0_2 = arith.constant 0 : index
    %3 = vector.load %arg4[%c0, %c0_1, %c0_2] : memref<1x4x256xf32, #tpu.memory_space<vmem>>, vector<1x4x128xf32>
    %4 = vector.shape_cast %3 : vector<1x4x128xf32> to vector<4x128xf32>
    %cst = arith.constant 9.99999997E-7 : f32
    %5 = vector.broadcast %cst : f32 to vector<4x128xf32>
    %6 = arith.maximumf %4, %5 : vector<4x128xf32>
    %c0_3 = arith.constant 0 : index
    %c0_4 = arith.constant 0 : index
    %7 = vector.load %arg6[%c0_3, %c0_4] : memref<4x128xf32, #tpu.memory_space<vmem>>, vector<4x128xf32>
    %8 = arith.maximumf %7, %4 : vector<4x128xf32>
    %c0_5 = arith.constant 0 : index
    %c0_6 = arith.constant 0 : index
    %9 = vector.load %arg6[%c0_5, %c0_6] : memref<4x128xf32, #tpu.memory_space<vmem>>, vector<4x128xf32>
    tpu.vector_store %arg6[%c0_5, %c0_6], %8 {strides = array<i32>} : memref<4x128xf32, #tpu.memory_space<vmem>>, vector<4x128xf32>,
    %c0_7 = arith.constant 0 : index
    %c0_8 = arith.constant 0 : index
    %10 = vector.load %arg7[%c0_7, %c0_8] : memref<4x128xf32, #tpu.memory_space<vmem>>, vector<4x128xf32>
    %11 = arith.addf %10, %6 : vector<4x128xf32>
    %c0_9 = arith.constant 0 : index
    %c0_10 = arith.constant 0 : index
    %12 = vector.load %arg7[%c0_9, %c0_10] : memref<4x128xf32, #tpu.memory_space<vmem>>, vector<4x128xf32>
    tpu.vector_store %arg7[%c0_9, %c0_10], %11 {strides = array<i32>} : memref<4x128xf32, #tpu.memory_space<vmem>>, vector<4x128xf32>,
    %c0_11 = arith.constant 0 : index
    %c0_12 = arith.constant 0 : index
    %c128 = arith.constant 128 : index
    %13 = vector.load %arg4[%c0_11, %c0_12, %c128] : memref<1x4x256xf32, #tpu.memory_space<vmem>>, vector<1x4x128xf32>
    %14 = vector.shape_cast %13 : vector<1x4x128xf32> to vector<4x128xf32>
    %cst_13 = arith.constant 9.99999997E-7 : f32
    %15 = vector.broadcast %cst_13 : f32 to vector<4x128xf32>
    %16 = arith.maximumf %14, %15 : vector<4x128xf32>
    %c0_14 = arith.constant 0 : index
    %c0_15 = arith.constant 0 : index
    %17 = vector.load %arg6[%c0_14, %c0_15] : memref<4x128xf32, #tpu.memory_space<vmem>>, vector<4x128xf32>
    %18 = arith.maximumf %17, %14 : vector<4x128xf32>
    %c0_16 = arith.constant 0 : index
    %c0_17 = arith.constant 0 : index
    %19 = vector.load %arg6[%c0_16, %c0_17] : memref<4x128xf32, #tpu.memory_space<vmem>>, vector<4x128xf32>
    tpu.vector_store %arg6[%c0_16, %c0_17], %18 {strides = array<i32>} : memref<4x128xf32, #tpu.memory_space<vmem>>, vector<4x128xf32>,
    %c0_18 = arith.constant 0 : index
    %c0_19 = arith.constant 0 : index
    %20 = vector.load %arg7[%c0_18, %c0_19] : memref<4x128xf32, #tpu.memory_space<vmem>>, vector<4x128xf32>
    %21 = arith.addf %20, %16 : vector<4x128xf32>
    %c0_20 = arith.constant 0 : index
    %c0_21 = arith.constant 0 : index
    %22 = vector.load %arg7[%c0_20, %c0_21] : memref<4x128xf32, #tpu.memory_space<vmem>>, vector<4x128xf32>
    tpu.vector_store %arg7[%c0_20, %c0_21], %21 {strides = array<i32>} : memref<4x128xf32, #tpu.memory_space<vmem>>, vector<4x128xf32>,
    %c0_i32_22 = arith.constant 0 : i32
    %23 = arith.cmpi eq, %arg2, %c0_i32_22 : i32
    %24 = arith.extui %23 : i1 to i32
    %c0_i32_23 = arith.constant 0 : i32
    %25 = arith.cmpi ne, %24, %c0_i32_23 : i32
    scf.if %25 {
      %c0_24 = arith.constant 0 : index
      %c0_25 = arith.constant 0 : index
      %26 = vector.load %arg6[%c0_24, %c0_25] : memref<4x128xf32, #tpu.memory_space<vmem>>, vector<4x128xf32>
      %cst_26 = arith.constant dense<0xFF800000> : vector<4xf32>
      %27 = vector.multi_reduction <maximumf>, %26, %cst_26 [1] : vector<4x128xf32> to vector<4xf32>
      %28 = vector.shape_cast %27 : vector<4xf32> to vector<4x1xf32>
      %c0_27 = arith.constant 0 : index
      %c0_28 = arith.constant 0 : index
      %29 = vector.load %arg7[%c0_27, %c0_28] : memref<4x128xf32, #tpu.memory_space<vmem>>, vector<4x128xf32>
      %cst_29 = arith.constant dense<0.000000e+00> : vector<4xf32>
      %30 = vector.multi_reduction <add>, %29, %cst_29 [1] : vector<4x128xf32> to vector<4xf32>
      %31 = vector.shape_cast %30 : vector<4xf32> to vector<4x1xf32>
      %cst_30 = arith.constant 3.906250e-03 : f32
      %32 = vector.broadcast %cst_30 : f32 to vector<4x1xf32>
      %33 = arith.mulf %31, %32 : vector<4x1xf32>
      %c0_31 = arith.constant 0 : index
      %c0_32 = arith.constant 0 : index
      %c0_33 = arith.constant 0 : index
      %34 = vector.load %arg5[%c0_31, %c0_32, %c0_33] : memref<1x4x2xf32, #tpu.memory_space<vmem>>, vector<1x4x1xf32>
      %35 = vector.shape_cast %34 : vector<1x4x1xf32> to vector<4x1xf32>
      %36 = vector.shape_cast %28 : vector<4x1xf32> to vector<1x4x1xf32>
      tpu.vector_store %arg5[%c0_31, %c0_32, %c0_33], %36 {strides = array<i32>} : memref<1x4x2xf32, #tpu.memory_space<vmem>>, vector<1x4x1xf32>,
      %c0_34 = arith.constant 0 : index
      %c0_35 = arith.constant 0 : index
      %c1 = arith.constant 1 : index
      %37 = vector.load %arg5[%c0_34, %c0_35, %c1] : memref<1x4x2xf32, #tpu.memory_space<vmem>>, vector<1x4x1xf32>
      %38 = vector.shape_cast %37 : vector<1x4x1xf32> to vector<4x1xf32>
      %39 = vector.shape_cast %33 : vector<4x1xf32> to vector<1x4x1xf32>
      tpu.vector_store %arg5[%c0_34, %c0_35, %c1], %39 {strides = array<i32>} : memref<1x4x2xf32, #tpu.memory_space<vmem>>, vector<1x4x1xf32>,
    } else {
    }
    return
  }
  func.func @transform_0(%arg0: i32, %arg1: i32, %arg2: i32) -> i32 {
    %c0_i32 = arith.constant 0 : i32
    %c0_i32_0 = arith.constant 0 : i32
    return %c0_i32 : i32
  }
  func.func @transform_1(%arg0: i32, %arg1: i32, %arg2: i32) -> (i32, i32, i32) {
    %c0_i32 = arith.constant 0 : i32
    return %arg0, %arg1, %arg2 : i32, i32, i32
  }
  func.func @transform_2(%arg0: i32, %arg1: i32, %arg2: i32) -> (i32, i32, i32) {
    %c0_i32 = arith.constant 0 : i32
    %c0_i32_0 = arith.constant 0 : i32
    return %arg0, %arg1, %c0_i32 : i32, i32, i32
  }
}

</mosaic_0001>

<llo_original>
// kernel: adaptive_gem_concat_pool2d.1
$region0: #{adaptive_gem_concat_pool2d.1}
  #allocation0 [shape = 'u32[]', space=smem, size = 0x4, offset = 0x4, fixed_abs, tag = 'smem constant byte address 0x4 - core index']
  #allocation1 [shape = 'u32[144,128]{1,0:T(1,128)}', space=vmem, size = 0x12000, scoped, tag = 'internal scratch']
  #allocation2 [shape = 'f32[4,128]{1,0:T(4,128)}', space=vmem, size = 0x800, scoped, tag = 'scratch operand']
  #allocation3 [shape = 'f32[4,128]{1,0:T(4,128)}', space=vmem, size = 0x800, scoped, tag = 'scratch operand']
  #allocation4 [shape = 'f32[1]{0:T(128)S(6)}', space=smem, size = 0x200, scoped, tag = 'scoped memory for adaptive_gem_concat_pool2d.1']
  %s0 = inlined_call_operand.<no memory space> [shape: f32[1], index: 0, kind: input, shape index: {}]
  %s1 = inlined_call_operand.vmem [shape: f32[2,4,256], index: 1, kind: input, shape index: {}]
  %s2 = inlined_call_operand.vmem [shape: f32[2,4,2], index: 2, kind: output, shape index: {}]
  %s3 = sld [smem:[#allocation0]]
  $region49: #{adaptive_gem_concat_pool2d.1} parent=0
    _
  %s5 = ssub.s32 1, %s3
  %s6 = scalar_select 0, %s5, %s3
  %7 = sst [smem:[#allocation4]] %s0
  loop: start=0, step=1, limit=4
  $region2: #{adaptive_gem_concat_pool2d.1} parent=0 // loop_pre_header
    _
  $region3: #{adaptive_gem_concat_pool2d.1} parent=0 // loop_header
    %s9 = sphi 0, %s13
    %p10 = scmp.ge.s32.totalorder %s9, 4
    %s16 = sphi 0, %s35
    %s17 = sphi 0, %s31
    %s18 = sphi 0, %s27
    %s19 = sphi 0, %s16
    %s20 = sphi 0, %s17
    %s21 = sphi 0, %s18
    %s22 = sphi 0, %s19
    %s23 = sphi 0, %s20
    %s24 = sphi 0, %s21
    %s36 = sphi 0, %s36
    %s38 = sphi 0, %s36
    %s39 = sphi 0, %s38
    %s53 = sphi 0, %s39
    %s63 = sphi 0, %s65
    %s66 = sphi 0, %s63
    %s67 = sphi 0, %s66
    %s83 = sphi 0, %s67
    %s91 = sphi 0, %s93
    %s94 = sphi 0, %s91
    %s95 = sphi 0, %s94
    %s111 = sphi 0, %s95
  $region4: #{adaptive_gem_concat_pool2d.1} parent=0 // loop_header_branch
    %12 = sbr.rel (%p10) target = $region8
  $region5: #{adaptive_gem_concat_pool2d.1} parent=0 // loop_body
    %s14 = ssub.s32 %s9, 1
    %s15 = ssub.s32 %s9, 2
    %s25 = sadd.s32 1, %s18
    %p26 = scmp.ge.s32.totalorder %s25, 1
    %s27 = scalar_select %p26, 0, %s25
    %s28 = sadd.s32 1, %s17
    %s29 = scalar_select %p26, %s28, %s17
    %p30 = scmp.ge.s32.totalorder %s29, 1
    %s31 = scalar_select %p30, 0, %s29
    %s32 = sadd.s32 1, %s16
    %s33 = scalar_select %p30, %s32, %s16
    %p34 = scmp.ge.s32.totalorder %s33, 2
    %s35 = scalar_select %p34, 0, %s33
    %s37 = sadd.s32 %s36, 1
    %p40 = scmp.eq.s32.totalorder %s9, 1
    %p41 = scmp.ne.s32.totalorder %s36, %s38
    %p42 = scmp.eq.s32.totalorder %s9, 0
    %p43 = por %p41, %p42
    %p44 = scmp.ne.s32.totalorder %s36, %s38
    %p45 = scmp.eq.s32.totalorder %s14, 1
    %p46 = por %p44, %p45
    %p47 = scmp.ne.s32.totalorder %s38, %s39
    %p48 = scmp.eq.s32.totalorder %s14, 0
    %p49 = por %p47, %p48
    %p50 = scmp.ne.s32.totalorder %s38, %s39
    %p51 = scmp.eq.s32.totalorder %s15, 1
    %p52 = por %p50, %p51
    %p54 = scmp.ne.s32.totalorder %s39, %s53
    %p55 = scmp.eq.s32.totalorder %s15, 0
    %p56 = por %p54, %p55
    %s57 = ssub.s32 %s16, %s35
    %s58 = ssub.s32 %s17, %s31
    %s59 = sor.u32 %s57, %s58
    %s60 = ssub.s32 %s18, %s27
    %s61 = sor.u32 %s59, %s60
    %p62 = scmp.eq.s32.totalorder %s61, 0
    %s64 = sadd.s32 %s63, 1
    %s65 = scalar_select %p62, %s63, %s64
    %p68 = pneg %p62
    %p69 = scmp.eq.s32.totalorder %s9, 1
    %p70 = por %p68, %p69
    %p71 = scmp.ne.s32.totalorder %s63, %s66
    %p72 = scmp.eq.s32.totalorder %s9, 0
    %p73 = por %p71, %p72
    %p74 = scmp.ne.s32.totalorder %s63, %s66
    %p75 = scmp.eq.s32.totalorder %s14, 1
    %p76 = por %p74, %p75
    %p77 = scmp.ne.s32.totalorder %s66, %s67
    %p78 = scmp.eq.s32.totalorder %s14, 0
    %p79 = por %p77, %p78
    %p80 = scmp.ne.s32.totalorder %s66, %s67
    %p81 = scmp.eq.s32.totalorder %s15, 1
    %p82 = por %p80, %p81
    %p84 = scmp.ne.s32.totalorder %s67, %s83
    %p85 = scmp.eq.s32.totalorder %s15, 0
    %p86 = por %p84, %p85
    %s87 = ssub.s32 %s16, %s35
    %s88 = ssub.s32 %s17, %s31
    %s89 = sor.u32 %s87, %s88
    %p90 = scmp.eq.s32.totalorder %s89, 0
    %s92 = sadd.s32 %s91, 1
    %s93 = scalar_select %p90, %s91, %s92
    %p96 = pneg %p90
    %p97 = scmp.eq.s32.totalorder %s9, 1
    %p98 = por %p96, %p97
    %p99 = scmp.ne.s32.totalorder %s91, %s94
    %p100 = scmp.eq.s32.totalorder %s9, 0
    %p101 = por %p99, %p100
    %p102 = scmp.ne.s32.totalorder %s91, %s94
    %p103 = scmp.eq.s32.totalorder %s14, 1
    %p104 = por %p102, %p103
    %p105 = scmp.ne.s32.totalorder %s94, %s95
    %p106 = scmp.eq.s32.totalorder %s14, 0
    %p107 = por %p105, %p106
    %p108 = scmp.ne.s32.totalorder %s94, %s95
    %p109 = scmp.eq.s32.totalorder %s15, 1
    %p110 = por %p108, %p109
    %p112 = scmp.ne.s32.totalorder %s95, %s111
    %p113 = scmp.eq.s32.totalorder %s15, 0
    %p114 = por %p112, %p113
    %p115 = scmp.le.s32.totalorder 1, %s9
    %p116 = scmp.lt.s32.totalorder %s9, 3
    %p117 = pnand %p115, %p116
    %p118 = pneg %p117
    // Predicated region
    $region9: #{adaptive_gem_concat_pool2d.1} parent=5 // pred_check
      _
    $region10: #{adaptive_gem_concat_pool2d.1} parent=5 // pred_check_branch
      %120 = sbr.rel (%p117) target = $region12
    $region11: #{adaptive_gem_concat_pool2d.1} parent=5 // pred_region
      %s121 = ssub.s32 %s9, 1
      // Predicated region
      $region13: #{adaptive_gem_concat_pool2d.1} parent=11 // pred_check
        %p122 = pneg %p49
      $region14: #{adaptive_gem_concat_pool2d.1} parent=11 // pred_check_branch
        %124 = sbr.rel (%p122) target = $region16
      $region15: #{adaptive_gem_concat_pool2d.1} parent=11 // pred_region
        _
      $region16: #{adaptive_gem_concat_pool2d.1} parent=11 // pred_fallthru
        _
    $region12: #{adaptive_gem_concat_pool2d.1} parent=5 // pred_fallthru
      _
    %p125 = scmp.lt.s32.totalorder %s9, 2
    // Predicated region
    $region17: #{adaptive_gem_concat_pool2d.1} parent=5 // pred_check
      %p126 = pneg %p125
    $region18: #{adaptive_gem_concat_pool2d.1} parent=5 // pred_check_branch
      %128 = sbr.rel (%p126) target = $region20
    $region19: #{adaptive_gem_concat_pool2d.1} parent=5 // pred_region
      // Predicated region
      $region21: #{adaptive_gem_concat_pool2d.1} parent=19 // pred_check
        %p129 = pneg %p73
      $region22: #{adaptive_gem_concat_pool2d.1} parent=19 // pred_check_branch
        %131 = sbr.rel (%p129) target = $region24
      $region23: #{adaptive_gem_concat_pool2d.1} parent=19 // pred_region
        %s132 = smul.u32 2, %s18
        %p133 = scmp.lt.s32.totalorder %s16, 1
        %s134 = scalar_select %p133, %s16, 1
        %p135 = scmp.lt.s32.totalorder %s17, 0
        %s136 = scalar_select %p135, %s17, 0
        %p137 = scmp.lt.s32.totalorder %s132, 1
        %s138 = scalar_select %p137, %s132, 1
        %s139 = smul.addr %s136, 2
        %s140 = sadd.s32 %s138, %s139
        %s141 = smul.addr %s134, 2
        %s142 = sadd.s32 %s140, %s141
        %s143 = smul.addr %s142, 4
        %s144 = scalar_lea.vmem %s1, %s143
        %s145 = smul.u32 2, %s18
      $region24: #{adaptive_gem_concat_pool2d.1} parent=19 // pred_fallthru
        _
    $region20: #{adaptive_gem_concat_pool2d.1} parent=5 // pred_fallthru
      _
    %p146 = scmp.le.s32.totalorder 1, %s9
    %p147 = scmp.lt.s32.totalorder %s9, 3
    %p148 = pnand %p146, %p147
    %p149 = pneg %p148
    // Predicated region
    $region25: #{adaptive_gem_concat_pool2d.1} parent=5 // pred_check
      _
    $region26: #{adaptive_gem_concat_pool2d.1} parent=5 // pred_check_branch
      %151 = sbr.rel (%p148) target = $region28
    $region27: #{adaptive_gem_concat_pool2d.1} parent=5 // pred_region
      %s152 = ssub.s32 %s9, 1
      %p153 = pneg %p49
      %p154 = pneg %p46
      %s155 = smul.u32 2, %s21
      %p156 = scmp.lt.s32.totalorder %s19, 1
      %s157 = scalar_select %p156, %s19, 1
      %p158 = scmp.lt.s32.totalorder %s20, 0
      %s159 = scalar_select %p158, %s20, 0
      %p160 = scmp.lt.s32.totalorder %s155, 1
      %s161 = scalar_select %p160, %s155, 1
      %s162 = smul.addr %s159, 2
      %s163 = sadd.s32 %s161, %s162
      %s164 = smul.addr %s157, 2
      %s165 = sadd.s32 %s163, %s164
      %s166 = smul.addr %s165, 4
      %s167 = scalar_lea.vmem %s1, %s166
      %p168 = pneg %p79
      %p169 = pneg %p76
      %p170 = pneg %p107
      %p171 = pneg %p104
      %p172 = scmp.lt.s32.totalorder %s19, 1
      %s173 = scalar_select %p172, %s19, 1
      %p174 = scmp.lt.s32.totalorder %s20, 0
      %s175 = scalar_select %p174, %s20, 0
      %s176 = sadd.s32 %s175, %s173
      %s177 = smul.addr %s176, 4
      %s178 = scalar_lea.vmem %s2, %s177
      %s179 = smul.u32 2, %s21
      %p180 = scmp.lt.s32.totalorder %s19, 1
      %s181 = scalar_select %p180, %s19, 1
      %p182 = scmp.lt.s32.totalorder %s20, 0
      %s183 = scalar_select %p182, %s20, 0
      %p184 = scmp.lt.s32.totalorder %s179, 1
      %s185 = scalar_select %p184, %s179, 1
      %s186 = smul.addr %s183, 2
      %s187 = sadd.s32 %s185, %s186
      %s188 = smul.addr %s181, 2
      %s189 = sadd.s32 %s187, %s188
      %s190 = smul.addr %s189, 4
      %s191 = scalar_lea.vmem %s1, %s190
      %s192 = smul.u32 2, %s21
      %p193 = scmp.lt.s32.totalorder %s19, 1
      %s194 = scalar_select %p193, %s19, 1
      %p195 = scmp.lt.s32.totalorder %s20, 0
      %s196 = scalar_select %p195, %s20, 0
      %s197 = sadd.s32 %s196, %s194
      %s198 = smul.addr %s197, 4
      %s199 = scalar_lea.vmem %s2, %s198
      %p200 = scmp.eq.s32.totalorder %s21, 0
      // Predicated region
      $region29: #{adaptive_gem_concat_pool2d.1} parent=27 // pred_check
        %p201 = pneg %p200
      $region30: #{adaptive_gem_concat_pool2d.1} parent=27 // pred_check_branch
        %203 = sbr.rel (%p201) target = $region32
      $region31: #{adaptive_gem_concat_pool2d.1} parent=27 // pred_region
        %204 = vst [vmem:[#allocation2] sm:$0xf] -inf
        %205 = vst [vmem:[#allocation3] sm:$0xf] 0.0
      $region32: #{adaptive_gem_concat_pool2d.1} parent=27 // pred_fallthru
        _
      %v206 = vld [vmem:[%s191] sm:$0xf]
      %v207 = vmax.f32 %v206, 1e-06
      %v208 = vld [vmem:[#allocation2] sm:$0xf]
      %v209 = vmax.f32 %v208, %v206
      %210 = vst [vmem:[#allocation2] sm:$0xf] %v209
      %v211 = vld [vmem:[#allocation3] sm:$0xf]
      %v212 = vadd.f32 %v211, %v207
      %213 = vst [vmem:[#allocation3] sm:$0xf] %v212
      %v214 = vld [vmem:[%s191 + $0x4] sm:$0xf]
      %v215 = vmax.f32 %v214, 1e-06
      %v216 = vld [vmem:[#allocation2] sm:$0xf]
      %v217 = vmax.f32 %v216, %v214
      %218 = vst [vmem:[#allocation2] sm:$0xf] %v217
      %v219 = vld [vmem:[#allocation3] sm:$0xf]
      %v220 = vadd.f32 %v219, %v215
      %221 = vst [vmem:[#allocation3] sm:$0xf] %v220
      // Predicated region
      $region33: #{adaptive_gem_concat_pool2d.1} parent=27 // pred_check
        %p222 = pneg %p200
      $region34: #{adaptive_gem_concat_pool2d.1} parent=27 // pred_check_branch
        %224 = sbr.rel (%p222) target = $region36
      $region35: #{adaptive_gem_concat_pool2d.1} parent=27 // pred_region
        %v225 = vld [vmem:[#allocation2] sm:$0xf]
        %vm226 = vcmask 1043456
        %v227 = vsel %vm226, %v225, -inf
        %228 = vmax.xlane.f32.xlu0 %v227
        %v229 = vpop.xlane.xlu0 %228
        %v230 = vld [vmem:[#allocation3] sm:$0xf]
        %v231 = vsel %vm226, %v230, 0.0
        %232 = vadd.xlane.f32.xlu0 %v231
        %v233 = vpop.xlane.xlu0 %232
        %v234 = vmul.f32 %v233, 0.00390625
        %vm235 = vcmask 3072
        %236 = vst.msk [vmem:[%s199] sm:$0xf] %vm235, %v229
        %vm237 = vcmask 11272
        %238 = vst.msk [vmem:[%s199] sm:$0xf] %vm237, %v234
      $region36: #{adaptive_gem_concat_pool2d.1} parent=27 // pred_fallthru
        _
      %p239 = scmp.lt.s32.totalorder %s19, 1
      %s240 = scalar_select %p239, %s19, 1
      %p241 = scmp.lt.s32.totalorder %s20, 0
      %s242 = scalar_select %p241, %s20, 0
      %s243 = sadd.s32 %s242, %s240
      %s244 = smul.addr %s243, 4
      %s245 = scalar_lea.vmem %s2, %s244
      // Predicated region
      $region37: #{adaptive_gem_concat_pool2d.1} parent=27 // pred_check
        %p246 = pneg %p104
      $region38: #{adaptive_gem_concat_pool2d.1} parent=27 // pred_check_branch
        %248 = sbr.rel (%p246) target = $region40
      $region39: #{adaptive_gem_concat_pool2d.1} parent=27 // pred_region
        _
      $region40: #{adaptive_gem_concat_pool2d.1} parent=27 // pred_fallthru
        _
    $region28: #{adaptive_gem_concat_pool2d.1} parent=5 // pred_fallthru
      _
    %p249 = scmp.le.s32.totalorder 2, %s9
    // Predicated region
    $region41: #{adaptive_gem_concat_pool2d.1} parent=5 // pred_check
      %p250 = pneg %p249
    $region42: #{adaptive_gem_concat_pool2d.1} parent=5 // pred_check_branch
      %252 = sbr.rel (%p250) target = $region44
    $region43: #{adaptive_gem_concat_pool2d.1} parent=5 // pred_region
      %s253 = ssub.s32 %s9, 2
      // Predicated region
      $region45: #{adaptive_gem_concat_pool2d.1} parent=43 // pred_check
        %p254 = pneg %p110
      $region46: #{adaptive_gem_concat_pool2d.1} parent=43 // pred_check_branch
        %256 = sbr.rel (%p254) target = $region48
      $region47: #{adaptive_gem_concat_pool2d.1} parent=43 // pred_region
        %p257 = scmp.lt.s32.totalorder %s22, 1
        %s258 = scalar_select %p257, %s22, 1
        %p259 = scmp.lt.s32.totalorder %s23, 0
        %s260 = scalar_select %p259, %s23, 0
        %s261 = sadd.s32 %s260, %s258
        %s262 = smul.addr %s261, 4
        %s263 = scalar_lea.vmem %s2, %s262
      $region48: #{adaptive_gem_concat_pool2d.1} parent=43 // pred_fallthru
        _
    $region44: #{adaptive_gem_concat_pool2d.1} parent=5 // pred_fallthru
      _
  $region6: #{adaptive_gem_concat_pool2d.1} parent=0 // loop_footer
    %s13 = sadd.s32 1, %s9
  $region7: #{adaptive_gem_concat_pool2d.1} parent=0 // loop_footer_branch
    %8 = sbr.rel target = $region3
  $region8: #{adaptive_gem_concat_pool2d.1} parent=0 // loop_exit
    _

</llo_original>
